<compile_context>
chip_gen: v6e
topology: v6e:2x2x1
jax: 0.10.0
libtpu: 0.0.40
codegen_flags: <defaults>
</compile_context>

<pallas_src>
import functools

import jax
import jax.numpy as jnp
from jax import lax
from jax.experimental import pallas as pl
from jax.experimental.pallas import tpu as pltpu


def _round_up(x: int, m: int) -> int:
    return ((x + m - 1) // m) * m


def _pick_tile(dim: int, unit: int, target: int) -> int:
    """Largest multiple of `unit` that divides `dim` and is <= target.

    `dim` is always a multiple of `unit`, so this always succeeds.
    """
    t = (min(target, dim) // unit) * unit
    while t > unit:
        if dim % t == 0:
            return t
        t -= unit
    return unit


# ---------------------------------------------------------------------------
# Kernels
# ---------------------------------------------------------------------------
def _linear_tiled_kernel(x_ref, w_ref, b_ref, o_ref, acc_ref):
    # x_ref:   (tm, tk)   activation tile (compute dtype)
    # w_ref:   (tn, tk)   weight tile, PyTorch (out, in) layout (compute dtype)
    # b_ref:   (1,  tn)   f32 bias tile (indexed by N axis only)
    # o_ref:   (tm, tn)   output tile
    # acc_ref: (tm, tn)   f32 accumulator scratch (resident across K steps)
    k = pl.program_id(2)

    @pl.when(k == 0)
    def _():
        # Fold the bias into the accumulator init -> epilogue is a plain store.
        acc_ref[...] = jnp.broadcast_to(b_ref[...], acc_ref.shape)

    # x @ w.T on the MXU; weight never transposed in HBM.
    acc_ref[...] += lax.dot_general(
        x_ref[...],
        w_ref[...],
        dimension_numbers=(((1,), (1,)), ((), ())),
        preferred_element_type=jnp.float32,
    )

    @pl.when(k == pl.num_programs(2) - 1)
    def _():
        o_ref[...] = acc_ref[...].astype(o_ref.dtype)


def _linear_single_block_kernel(x_ref, w_ref, b_ref, o_ref):
    # Whole problem in one VMEM block, no padding, no grid.
    o_ref[...] = (
        lax.dot_general(
            x_ref[...],
            w_ref[...],
            dimension_numbers=(((1,), (1,)), ((), ())),
            preferred_element_type=jnp.float32,
        )
        + b_ref[...]
    ).astype(o_ref.dtype)


# ---------------------------------------------------------------------------
# Wrapper
# ---------------------------------------------------------------------------
@functools.partial(jax.jit, static_argnames=("tm", "tn", "tk", "compute_dtype"))
def linear_forward(x, weight, bias, *, tm=512, tn=512, tk=1024, compute_dtype=None):
    """y = x @ weight.T + bias.

    x:      (B, D_in)     float32
    weight: (D_out, D_in) float32  (PyTorch convention; never transposed in HBM)
    bias:   (D_out,)      float32
    compute_dtype: optional (e.g. jnp.bfloat16) for the x/weight streams; the
                   accumulation and output stay float32.
    returns (B, D_out)    float32
    """
    B, D_in = x.shape
    D_out = weight.shape[0]
    out_dtype = x.dtype
    cdt = out_dtype if compute_dtype is None else jnp.dtype(compute_dtype)

    bias2d = bias.reshape(1, D_out).astype(jnp.float32)

    # ---------------- Small-problem fast path: one un-padded block ----------
    footprint = 4 * (B * D_in + D_out * D_in + B * D_out + D_out)
    if B <= 128 and D_in <= 512 and D_out <= 512 and footprint <= (2 << 20):
        return pl.pallas_call(
            _linear_single_block_kernel,
            out_shape=jax.ShapeDtypeStruct((B, D_out), out_dtype),
        )(x.astype(cdt), weight.astype(cdt), bias2d)

    # ---------------- General tiled path ------------------------------------
    # Round to (8, 128) alignment ONLY (not to tile size), then choose tiles
    # that divide the aligned dims exactly.
    M = _round_up(B, 8)
    N = _round_up(D_out, 128)
    K = _round_up(D_in, 128)

    tm = _pick_tile(M, 8, tm)
    tn = _pick_tile(N, 128, tn)
    tk = _pick_tile(K, 128, tk)

    # Keep both TensorCores busy on v7x: ensure the parallel (M, N) grid has
    # at least 2 blocks when the problem allows it.
    if (M // tm) * (N // tn) == 1:
        if N >= 256 and (N // 2) % 128 == 0:
            tn = N // 2
        elif M >= 16 and (M // 2) % 8 == 0:
            tm = M // 2

    grid = (M // tm, N // tn, K // tk)

    # Pad only the dims that actually need it (each pad is a real HBM pass).
    x_c = x.astype(cdt)
    w_c = weight.astype(cdt)
    x_p = x_c if (M == B and K == D_in) else jnp.pad(x_c, ((0, M - B), (0, K - D_in)))
    w_p = w_c if (N == D_out and K == D_in) else jnp.pad(w_c, ((0, N - D_out), (0, K - D_in)))
    b_p = bias2d if N == D_out else jnp.pad(bias2d, ((0, 0), (0, N - D_out)))

    # VMEM limit derived from the tile footprint (double-buffered in/out +
    # f32 accumulator + headroom), capped for v7x's 64 MiB per-TC VMEM.
    in_isz = jnp.dtype(cdt).itemsize
    out_isz = jnp.dtype(out_dtype).itemsize
    vmem_bytes = (
        2 * (tm * tk * in_isz + tn * tk * in_isz + tn * 4)   # double-buffered inputs
        + 2 * tm * tn * out_isz                              # double-buffered output
        + tm * tn * 4                                        # accumulator scratch
    )
    vmem_limit = min(max(int(vmem_bytes * 1.5) + (1 << 20), 8 << 20), 56 << 20)

    cost = pl.CostEstimate(
        flops=2 * M * N * K,
        transcendentals=0,
        bytes_accessed=in_isz * (M * K + N * K) + 4 * (M * N + N),
    )

    out_padded = pl.pallas_call(
        _linear_tiled_kernel,
        out_shape=jax.ShapeDtypeStruct((M, N), out_dtype),
        grid_spec=pltpu.PrefetchScalarGridSpec(
            num_scalar_prefetch=0,
            grid=grid,
            in_specs=[
                pl.BlockSpec((tm, tk), lambda i, j, k: (i, k)),   # x
                pl.BlockSpec((tn, tk), lambda i, j, k: (j, k)),   # weight (out, in)
                pl.BlockSpec((1, tn), lambda i, j, k: (0, j)),    # bias
            ],
            out_specs=pl.BlockSpec((tm, tn), lambda i, j, k: (i, j)),
            scratch_shapes=[pltpu.VMEM((tm, tn), jnp.float32)],
        ),
        compiler_params=pltpu.CompilerParams(
            dimension_semantics=("parallel", "parallel", "arbitrary"),
            vmem_limit_bytes=vmem_limit,
        ),
        cost_estimate=cost,
    )(x_p, w_p, b_p)

    if M == B and N == D_out:
        return out_padded
    return out_padded[:B, :D_out]


# ---------------------------------------------------------------------------
# Self-test
# ---------------------------------------------------------------------------
if __name__ == "__main__":
    key = jax.random.PRNGKey(0)

    # --- Small shapes consistent with nn.Linear(input_dim, output_dim) ------
    batch, input_dim, output_dim = 8, 32, 16
    kx, kw, kb = jax.random.split(key, 3)

    x = jax.random.normal(kx, (batch, input_dim), dtype=jnp.float32)
    bound = 1.0 / (input_dim ** 0.5)
    weight = jax.random.uniform(kw, (output_dim, input_dim), dtype=jnp.float32,
                                minval=-bound, maxval=bound)
    bias = jax.random.uniform(kb, (output_dim,), dtype=jnp.float32,
                              minval=-bound, maxval=bound)

    out = linear_forward(x, weight, bias)
    jax.block_until_ready(out)
    ref = x @ weight.T + bias
    assert out.shape == (batch, output_dim)
    assert jnp.allclose(out, ref, atol=1e-5, rtol=1e-5)

    # --- Tiled path: unaligned B / D_in / D_out, multi-step K reduction -----
    b2, d_in2, d_out2 = 70, 1200, 200
    k1, k2, k3 = jax.random.split(jax.random.PRNGKey(1), 3)
    x2 = jax.random.normal(k1, (b2, d_in2), dtype=jnp.float32)
    w2 = jax.random.normal(k2, (d_out2, d_in2), dtype=jnp.float32) * 0.02
    bi2 = jax.random.normal(k3, (d_out2,), dtype=jnp.float32)

    out2 = linear_forward(x2, w2, bi2)
    jax.block_until_ready(out2)
    ref2 = x2 @ w2.T + bi2
    assert out2.shape == (b2, d_out2)
    assert jnp.allclose(out2, ref2, atol=1e-3, rtol=1e-4)

    # --- bf16 compute path (f32 accumulation), loose tolerance --------------
    out3 = linear_forward(x2, w2, bi2, compute_dtype=jnp.bfloat16)
    jax.block_until_ready(out3)
    assert out3.shape == (b2, d_out2)
    assert jnp.allclose(out3, ref2, atol=5e-2, rtol=5e-2)

    print("KERNEL_OK")
</pallas_src>

<mosaic_0001>
module attributes {stable_mosaic.version = 11 : i64} {
  func.func @_linear_single_block_kernel(%arg0: memref<8x32xf32, #tpu.memory_space<vmem>>, %arg1: memref<16x32xf32, #tpu.memory_space<vmem>>, %arg2: memref<1x16xf32, #tpu.memory_space<vmem>>, %arg3: memref<8x16xf32, #tpu.memory_space<vmem>>) attributes {dimension_semantics = [], scalar_prefetch = 0 : i64, scratch_operands = 0 : i64, tpu.core_type = #tpu.core_type<tc>} {
    %c0 = arith.constant 0 : index
    %c0_0 = arith.constant 0 : index
    %0 = vector.load %arg0[%c0, %c0_0] : memref<8x32xf32, #tpu.memory_space<vmem>>, vector<8x32xf32>
    %c0_1 = arith.constant 0 : index
    %c0_2 = arith.constant 0 : index
    %1 = vector.load %arg1[%c0_1, %c0_2] : memref<16x32xf32, #tpu.memory_space<vmem>>, vector<16x32xf32>
    %cst = arith.constant dense<0.000000e+00> : vector<8x16xf32>
    %2 = tpu.matmul %0, %1, %cst {dimension_numbers = #tpu.dot_dimension_numbers<[1], [1], [0], [0], [0, 0, 1, 0], [], []>} : vector<8x32xf32>, vector<16x32xf32>, vector<8x16xf32> -> vector<8x16xf32>
    %c0_3 = arith.constant 0 : index
    %c0_4 = arith.constant 0 : index
    %3 = vector.load %arg2[%c0_3, %c0_4] : memref<1x16xf32, #tpu.memory_space<vmem>>, vector<1x16xf32>
    %4 = vector.broadcast %3 : vector<1x16xf32> to vector<8x16xf32>
    %5 = arith.addf %2, %4 : vector<8x16xf32>
    %c0_5 = arith.constant 0 : index
    %c0_6 = arith.constant 0 : index
    %6 = vector.load %arg3[%c0_5, %c0_6] : memref<8x16xf32, #tpu.memory_space<vmem>>, vector<8x16xf32>
    tpu.vector_store %arg3[%c0_5, %c0_6], %5 {strides = array<i32>} : memref<8x16xf32, #tpu.memory_space<vmem>>, vector<8x16xf32>,
    return
  }
}

</mosaic_0001>

<llo_original>
// kernel: linear_forward.1
$region0: #{linear_forward.1}
  #allocation0 [shape = 'u32[]', space=smem, size = 0x4, offset = 0x4, fixed_abs, tag = 'smem constant byte address 0x4 - core index']
  #allocation1 [shape = 'u32[144,128]{1,0:T(1,128)}', space=vmem, size = 0x12000, scoped, tag = 'internal scratch']
  %s0 = inlined_call_operand.hbm [shape: f32[8,32], index: 0, kind: input, shape index: {}]
  %s1 = inlined_call_operand.hbm [shape: f32[16,32], index: 1, kind: input, shape index: {}]
  %s2 = inlined_call_operand.vmem [shape: f32[1,16], index: 2, kind: input, shape index: {}]
  %s3 = inlined_call_operand.hbm [shape: f32[8,16], index: 3, kind: output, shape index: {}]
  %s4 = sld [smem:[#allocation0]]
  $region30: #{linear_forward.1} parent=0
    _
  %s6 = ssub.s32 1, %s4
  %s7 = scalar_select 0, %s6, %s4
  $region1: #{linear_forward.1} parent=0
    #allocation2 [shape = 'u8[4096]{0}', space=vmem, size = 0x1000, scoped, tag = 'input window, operand 0, single buffered']
    #allocation3 [shape = 's32[1]{0}', space=sflag, size = 0x4, scoped, tag = 'scoped memory for linear_forward.1']
    #allocation4 [shape = 's32[1]{0}', space=sflag, size = 0x4, scoped, tag = 'scoped memory for linear_forward.1']
    #allocation5 [shape = 'u8[8192]{0}', space=vmem, size = 0x2000, scoped, tag = 'input window, operand 1, single buffered']
    #allocation6 [shape = 's32[1]{0}', space=sflag, size = 0x4, scoped, tag = 'scoped memory for linear_forward.1']
    #allocation7 [shape = 'u8[4096]{0}', space=vmem, size = 0x1000, scoped, tag = 'output window, operand 0, single buffered']
    %8 = vsyncpa [#allocation3], 0
    %9 = vsyncpa [#allocation6], 0
    %10 = vsyncpa [#allocation4], 0
    // Predicated region
    $region2: #{linear_forward.1} parent=1 // pred_check
      _
    $region3: #{linear_forward.1} parent=1 // pred_check_branch
      %12 = sbr.rel (0) target = $region5
    $region4: #{linear_forward.1} parent=1 // pred_region
      %s14 = ssub.s32 128, 128
      %15 = vsyncadd [#allocation3], %s14
      %s17 = sshll.u32 [#allocation2], 4
      %s18 = int_to_ptr.vmem [resolvable:$true] %s17
      %20 = dma.hbm_to_vmem [thread:$0]  %s0, 128, %s18, [#allocation3]
    $region5: #{linear_forward.1} parent=1 // pred_fallthru
      _
    // Predicated region
    $region6: #{linear_forward.1} parent=1 // pred_check
      _
    $region7: #{linear_forward.1} parent=1 // pred_check_branch
      %22 = sbr.rel (0) target = $region9
    $region8: #{linear_forward.1} parent=1 // pred_region
      %s24 = ssub.s32 256, 256
      %25 = vsyncadd [#allocation6], %s24
      %s26 = sshll.u32 [#allocation5], 4
      %s27 = int_to_ptr.vmem [resolvable:$true] %s26
      %32 = dma.hbm_to_vmem [thread:$0]  %s1, 256, %s27, [#allocation6], 128, 128, 8
    $region9: #{linear_forward.1} parent=1 // pred_fallthru
      _
    // Predicated region
    $region10: #{linear_forward.1} parent=1 // pred_check
      _
    $region11: #{linear_forward.1} parent=1 // pred_check_branch
      %34 = sbr.rel (0) target = $region13
    $region12: #{linear_forward.1} parent=1 // pred_region
      _
    $region13: #{linear_forward.1} parent=1 // pred_fallthru
      _
    // Predicated region
    $region14: #{linear_forward.1} parent=1 // pred_check
      _
    $region15: #{linear_forward.1} parent=1 // pred_check_branch
      %36 = sbr.rel (0) target = $region17
    $region16: #{linear_forward.1} parent=1 // pred_region
      %37 = dma.done [#allocation3], 128
    $region17: #{linear_forward.1} parent=1 // pred_fallthru
      _
    // Predicated region
    $region18: #{linear_forward.1} parent=1 // pred_check
      _
    $region19: #{linear_forward.1} parent=1 // pred_check_branch
      %39 = sbr.rel (0) target = $region21
    $region20: #{linear_forward.1} parent=1 // pred_region
      %40 = dma.done [#allocation6], 256
    $region21: #{linear_forward.1} parent=1 // pred_fallthru
      _
    %v41 = vld [vmem:[#allocation2] sm:$0xff]
    %v42 = vld [vmem:[#allocation5] sm:$0xff]
    %v43 = vld [vmem:[#allocation5 + $0x8] sm:$0xff]
    %v44 = vld [vmem:[%s2] sm:$0x1]
    %v46 = vlaneseq
    %v47 = vshrl.u32 %v46, 7
    %v48 = vsub.s32 0, %v47
    %v49 = vrot.slane %v44, %v48
    %vm51 = vcmask 261120
    %v53 = vsel %vm51, %v41, 0
    %v56 = vsel %vm51, %v42, 0
    %v59 = vsel %vm51, %v43, 0
    %61 = vmatprep.subr.mxu0 0.0
    %62 = vmatpush1.xpose.msra.mxu0 0.0
    %63 = vmatprep.subr.mxu0 0.0
    %64 = vmatpush1.xpose.msra.mxu0 0.0
    %65 = vmatprep.subr.mxu0 0.0
    %66 = vmatpush1.xpose.msra.mxu0 0.0
    %67 = vmatprep.subr.mxu0 0.0
    %68 = vmatpush1.xpose.msra.mxu0 0.0
    %69 = vmatprep.subr.mxu0 0.0
    %70 = vmatpush1.xpose.msra.mxu0 0.0
    %71 = vmatprep.subr.mxu0 0.0
    %72 = vmatpush1.xpose.msra.mxu0 0.0
    %73 = vmatprep.subr.mxu0 0.0
    %74 = vmatpush1.xpose.msra.mxu0 0.0
    %75 = vmatprep.subr.mxu0 0.0
    %76 = vmatpush1.xpose.msra.mxu0 0.0
    %77 = vmatprep.subr.mxu0 0.0
    %78 = vmatpush1.xpose.msra.mxu0 0.0
    %79 = vmatprep.subr.mxu0 0.0
    %80 = vmatpush1.xpose.msra.mxu0 0.0
    %81 = vmatprep.subr.mxu0 0.0
    %82 = vmatpush1.xpose.msra.mxu0 0.0
    %83 = vmatprep.subr.mxu0 0.0
    %84 = vmatpush1.xpose.msra.mxu0 0.0
    %85 = vmatprep.subr.mxu0 0.0
    %86 = vmatpush1.xpose.msra.mxu0 0.0
    %87 = vmatprep.subr.mxu0 0.0
    %88 = vmatpush1.xpose.msra.mxu0 0.0
    %89 = vmatprep.subr.mxu0 0.0
    %90 = vmatpush1.xpose.msra.mxu0 %v59
    %91 = vmatprep.subr.mxu0 0.0
    %92 = vmatpush1.xpose.msra.mxu0 %v56
    %93 = vmatprep.subr.mxu0 0.0
    %94 = vmatpush2.xpose.msra.mxu0 0.0
    %95 = vmatprep.subr.mxu0 0.0
    %96 = vmatpush2.xpose.msra.mxu0 0.0
    %97 = vmatprep.subr.mxu0 0.0
    %98 = vmatpush2.xpose.msra.mxu0 0.0
    %99 = vmatprep.subr.mxu0 0.0
    %100 = vmatpush2.xpose.msra.mxu0 0.0
    %101 = vmatprep.subr.mxu0 0.0
    %102 = vmatpush2.xpose.msra.mxu0 0.0
    %103 = vmatprep.subr.mxu0 0.0
    %104 = vmatpush2.xpose.msra.mxu0 0.0
    %105 = vmatprep.subr.mxu0 0.0
    %106 = vmatpush2.xpose.msra.mxu0 0.0
    %107 = vmatprep.subr.mxu0 0.0
    %108 = vmatpush2.xpose.msra.mxu0 0.0
    %109 = vmatprep.subr.mxu0 0.0
    %110 = vmatpush2.xpose.msra.mxu0 0.0
    %111 = vmatprep.subr.mxu0 0.0
    %112 = vmatpush2.xpose.msra.mxu0 0.0
    %113 = vmatprep.subr.mxu0 0.0
    %114 = vmatpush2.xpose.msra.mxu0 0.0
    %115 = vmatprep.subr.mxu0 0.0
    %116 = vmatpush2.xpose.msra.mxu0 0.0
    %117 = vmatprep.subr.mxu0 0.0
    %118 = vmatpush2.xpose.msra.mxu0 0.0
    %119 = vmatprep.subr.mxu0 0.0
    %120 = vmatpush2.xpose.msra.mxu0 0.0
    %121 = vmatprep.subr.mxu0 0.0
    %122 = vmatpush2.xpose.msra.mxu0 0.0
    %123 = vmatprep.subr.mxu0 0.0
    %124 = vmatpush2.xpose.msra.mxu0 0.0
    %125 = vmatprep.mubr.f32.mxu0 0.0
    %126 = vmatmul.mubr.f32.gmra.mxu0 %v53
    %v127 = vpop.f32.mrf.mxu0
    %v128 = vadd.f32 %v49, %v127
    %v129 = vpop.f32.mrf.mxu0
    %130 = vdwg.mxu0
    %vm131 = vcmask 130048
    %132 = vst.msk [vmem:[#allocation7] sm:$0xff] %vm131, %v128
    // Predicated region
    $region22: #{linear_forward.1} parent=1 // pred_check
      _
    $region23: #{linear_forward.1} parent=1 // pred_check_branch
      %134 = sbr.rel (0) target = $region25
    $region24: #{linear_forward.1} parent=1 // pred_region
      %s136 = ssub.s32 128, 128
      %137 = vsyncadd [#allocation4], %s136
      %s139 = sshll.u32 [#allocation7], 4
      %s140 = int_to_ptr.vmem [resolvable:$true] %s139
      %142 = dma.vmem_to_hbm [thread:$0]  %s140, 128, %s3, [#allocation4]
    $region25: #{linear_forward.1} parent=1 // pred_fallthru
      _
    // Predicated region
    $region26: #{linear_forward.1} parent=1 // pred_check
      _
    $region27: #{linear_forward.1} parent=1 // pred_check_branch
      %144 = sbr.rel (0) target = $region29
    $region28: #{linear_forward.1} parent=1 // pred_region
      %145 = dma.done [#allocation4], 128
    $region29: #{linear_forward.1} parent=1 // pred_fallthru
      _
    %146 = vsyncpa [#allocation3], 1
    %147 = vsyncpa [#allocation6], 1
    %148 = vsyncpa [#allocation4], 1

</llo_original>
